<compile_context>
chip_gen: v6e
topology: v6e:2x2x1
jax: 0.10.0
libtpu: 0.0.40
codegen_flags: <defaults>
</compile_context>

<pallas_src>
import functools
import math

import jax
import jax.numpy as jnp
from jax import lax
from jax.experimental import pallas as pl
from jax.experimental.pallas import tpu as pltpu

# ----------------------------- config (small, synthetic) --------------------
HIDDEN = 32
NUM_QO_HEADS = 4
NUM_KV_HEADS = 2
NUM_KV_GROUPS = NUM_QO_HEADS // NUM_KV_HEADS
HEAD_DIM = HIDDEN // NUM_QO_HEADS          # 8
QO_DIM = NUM_QO_HEADS * HEAD_DIM           # 32
KV_DIM = NUM_KV_HEADS * HEAD_DIM           # 16
SCALE = 1.0 / math.sqrt(HEAD_DIM)

PREFILL_LENS = [6, 8]                      # blen.prefills / indptr
INDPTR = [0, 6, 14]
DOFF = INDPTR[-1]                          # 14
MAX_PREFILL_LEN = 8
NUM_PREFILL_SEQS = len(PREFILL_LENS)

DECODE_BATCH = 2                           # blen.decode
DECODE_PAST_LENS = [5, 3]                  # cache lengths before append_kv
MAX_CACHE_LEN = 8

T_TOTAL = DOFF + DECODE_BATCH              # 16 tokens total


# ----------------------------- tiled linear projection kernel ---------------
def _matmul_kernel(x_ref, w_ref, o_ref, acc_ref):
    @pl.when(pl.program_id(2) == 0)
    def _():
        acc_ref[...] = jnp.zeros_like(acc_ref)

    acc_ref[...] += jnp.dot(x_ref[...], w_ref[...],
                            preferred_element_type=jnp.float32)

    @pl.when(pl.program_id(2) == pl.num_programs(2) - 1)
    def _():
        o_ref[...] = acc_ref[...].astype(o_ref.dtype)


def linear(x, w, *, out_dtype=None, tm=128, tn=128, tk=256):
    """x:[M,K] @ w:[K,N] -> [M,N]  (nn.Linear(bias=False), weight pre-transposed).

    bf16 operands, f32 accumulation in a VMEM scratch; tiled over (M, N, K)
    with the K axis marked "arbitrary" (accumulator) and M/N "parallel".
    At the toy sizes here the grid collapses to (1,1,1); at production sizes
    the same template double-buffers 128x128x256 tiles.
    """
    M, K = x.shape
    _, N = w.shape
    if out_dtype is None:
        out_dtype = x.dtype
    tm, tn, tk = min(tm, M), min(tn, N), min(tk, K)
    grid = (pl.cdiv(M, tm), pl.cdiv(N, tn), pl.cdiv(K, tk))
    return pl.pallas_call(
        _matmul_kernel,
        out_shape=jax.ShapeDtypeStruct((M, N), out_dtype),
        grid_spec=pltpu.PrefetchScalarGridSpec(
            num_scalar_prefetch=0,
            grid=grid,
            in_specs=[
                pl.BlockSpec((tm, tk), lambda i, j, k: (i, k)),
                pl.BlockSpec((tk, tn), lambda i, j, k: (k, j)),
            ],
            out_specs=pl.BlockSpec((tm, tn), lambda i, j, k: (i, j)),
            scratch_shapes=[pltpu.VMEM((tm, tn), jnp.float32)],
        ),
        compiler_params=pltpu.CompilerParams(
            dimension_semantics=("parallel", "parallel", "arbitrary")),
    )(x, w)


# ----------------------------- prefill attention kernel ---------------------
def _prefill_attn_kernel(lens_ref, q_ref, k_ref, v_ref, o_ref, *, scale, max_len):
    """One grid step = one sequence, all heads. Blocks are lane-dense
    ([ML, Hq*D] / [ML, Hkv*D]); K/V fetched once and shared by the GQA group."""
    s = pl.program_id(0)
    seq_len = lens_ref[s]
    q = q_ref[0]                                   # [ML, Hq*D]  bf16
    k = k_ref[0]                                   # [ML, Hkv*D] bf16
    v = v_ref[0]                                   # [ML, Hkv*D] bf16

    row = lax.broadcasted_iota(jnp.int32, (max_len, max_len), 0)
    col = lax.broadcasted_iota(jnp.int32, (max_len, max_len), 1)
    mask = (col <= row) & (col < seq_len)

    outs = []
    for kh in range(NUM_KV_HEADS):                 # static unroll
        k_h = k[:, kh * HEAD_DIM:(kh + 1) * HEAD_DIM]   # [ML, D]
        v_h = v[:, kh * HEAD_DIM:(kh + 1) * HEAD_DIM]   # [ML, D]
        for g in range(NUM_KV_GROUPS):
            h = kh * NUM_KV_GROUPS + g
            q_h = q[:, h * HEAD_DIM:(h + 1) * HEAD_DIM]  # [ML, D]
            scores = lax.dot_general(
                q_h, k_h, (((1,), (1,)), ((), ())),
                preferred_element_type=jnp.float32) * scale        # [ML, ML]
            scores = jnp.where(mask, scores, -1e30)
            m = jnp.max(scores, axis=-1, keepdims=True)
            p = jnp.exp(scores - m)                                 # f32
            denom = jnp.sum(p, axis=-1, keepdims=True)
            out_h = jnp.dot(p.astype(v_h.dtype), v_h,
                            preferred_element_type=jnp.float32) / denom
            outs.append(out_h)
    # single lane-dense store of the whole head slab
    o_ref[0] = jnp.concatenate(outs, axis=-1).astype(o_ref.dtype)


def batch_prefill(q_p, k_p, v_p, seq_lens):
    """q_p:[S,ML,Hq*D]  k_p/v_p:[S,ML,Hkv*D]  seq_lens:[S] -> [S,ML,Hq*D]."""
    S, ML, _ = q_p.shape
    grid_spec = pltpu.PrefetchScalarGridSpec(
        num_scalar_prefetch=1,
        grid=(S,),
        in_specs=[
            pl.BlockSpec((1, ML, QO_DIM), lambda s, lens: (s, 0, 0)),
            pl.BlockSpec((1, ML, KV_DIM), lambda s, lens: (s, 0, 0)),
            pl.BlockSpec((1, ML, KV_DIM), lambda s, lens: (s, 0, 0)),
        ],
        out_specs=pl.BlockSpec((1, ML, QO_DIM), lambda s, lens: (s, 0, 0)),
    )
    return pl.pallas_call(
        functools.partial(_prefill_attn_kernel, scale=SCALE, max_len=ML),
        grid_spec=grid_spec,
        out_shape=jax.ShapeDtypeStruct((S, ML, QO_DIM), q_p.dtype),
        compiler_params=pltpu.CompilerParams(dimension_semantics=("parallel",)),
    )(seq_lens, q_p, k_p, v_p)
    # TODO(synk): for long sequences (esp. v7x 64 MiB VMEM) convert the
    # [ML,ML] score block to a flash-style online-softmax over KV tiles.


# ----------------------------- decode attention kernel ----------------------
def _decode_attn_kernel(plens_ref, q_ref, kn_ref, vn_ref, kc_ref, vc_ref, o_ref,
                        *, scale, max_cache):
    """One grid step = one decode sequence, all heads; append_kv fused."""
    b = pl.program_id(0)
    past = plens_ref[b]
    clen = past + 1

    q = q_ref[0]                                   # [1, Hq*D]   bf16
    kn = kn_ref[0]                                 # [1, Hkv*D]  bf16
    vn = vn_ref[0]
    k = kc_ref[0]                                  # [MC, Hkv*D] bf16
    v = vc_ref[0]

    # append_kv: overwrite cache row `past` with the new token's k/v (in VMEM)
    rows = lax.broadcasted_iota(jnp.int32, (max_cache, KV_DIM), 0)
    k = jnp.where(rows == past, kn, k)
    v = jnp.where(rows == past, vn, v)

    col = lax.broadcasted_iota(jnp.int32, (1, max_cache), 1)

    outs = []
    for kh in range(NUM_KV_HEADS):                 # static unroll
        k_h = k[:, kh * HEAD_DIM:(kh + 1) * HEAD_DIM]   # [MC, D]
        v_h = v[:, kh * HEAD_DIM:(kh + 1) * HEAD_DIM]   # [MC, D]
        for g in range(NUM_KV_GROUPS):
            h = kh * NUM_KV_GROUPS + g
            q_h = q[:, h * HEAD_DIM:(h + 1) * HEAD_DIM]  # [1, D]
            scores = lax.dot_general(
                q_h, k_h, (((1,), (1,)), ((), ())),
                preferred_element_type=jnp.float32) * scale        # [1, MC]
            scores = jnp.where(col < clen, scores, -1e30)
            m = jnp.max(scores, axis=-1, keepdims=True)
            p = jnp.exp(scores - m)
            denom = jnp.sum(p, axis=-1, keepdims=True)
            out_h = jnp.dot(p.astype(v_h.dtype), v_h,
                            preferred_element_type=jnp.float32) / denom
            outs.append(out_h)
    o_ref[0] = jnp.concatenate(outs, axis=-1).astype(o_ref.dtype)


def batch_decode(q_d, k_new, v_new, k_cache, v_cache, past_lens):
    """q_d:[B,1,Hq*D]  k_new/v_new:[B,1,Hkv*D]  caches:[B,MC,Hkv*D]."""
    B = q_d.shape[0]
    MC = k_cache.shape[1]
    grid_spec = pltpu.PrefetchScalarGridSpec(
        num_scalar_prefetch=1,
        grid=(B,),
        in_specs=[
            pl.BlockSpec((1, 1, QO_DIM), lambda b, lens: (b, 0, 0)),
            pl.BlockSpec((1, 1, KV_DIM), lambda b, lens: (b, 0, 0)),
            pl.BlockSpec((1, 1, KV_DIM), lambda b, lens: (b, 0, 0)),
            pl.BlockSpec((1, MC, KV_DIM), lambda b, lens: (b, 0, 0)),
            pl.BlockSpec((1, MC, KV_DIM), lambda b, lens: (b, 0, 0)),
        ],
        out_specs=pl.BlockSpec((1, 1, QO_DIM), lambda b, lens: (b, 0, 0)),
    )
    return pl.pallas_call(
        functools.partial(_decode_attn_kernel, scale=SCALE, max_cache=MC),
        grid_spec=grid_spec,
        out_shape=jax.ShapeDtypeStruct((B, 1, QO_DIM), q_d.dtype),
        compiler_params=pltpu.CompilerParams(dimension_semantics=("parallel",)),
    )(past_lens, q_d, k_new, v_new, k_cache, v_cache)


# ----------------------------- full forward ---------------------------------
def llama_attention_forward(hidden_states, wq, wk, wv, wo,
                            decode_k_cache, decode_v_cache):
    # fused qkv_proj: one kernel, one lane-dense [T, (Hq+2*Hkv)*D] slab
    wqkv = jnp.concatenate([wq, wk, wv], axis=1)
    qkv = linear(hidden_states, wqkv)                  # [T, 48] bf16
    q_proj = qkv[:, :QO_DIM]
    k_proj = qkv[:, QO_DIM:QO_DIM + KV_DIM]
    v_proj = qkv[:, QO_DIM + KV_DIM:]

    stack_attn_output = []

    # ---------------- prefill path ----------------
    # TODO(synk): replace the host-side ragged pack/unpack with indptr-driven
    # scalar-prefetch index_maps so the kernel reads the token-major slab directly.
    def pack(x):
        segs = []
        for i in range(NUM_PREFILL_SEQS):
            s0, s1 = INDPTR[i], INDPTR[i + 1]
            seg = jnp.pad(x[s0:s1], ((0, MAX_PREFILL_LEN - (s1 - s0)), (0, 0)))
            segs.append(seg)
        return jnp.stack(segs)                         # [S, ML, width]

    q_p = pack(q_proj)                                 # [S, ML, Hq*D]
    k_p = pack(k_proj)                                 # init_kv: prefill cache
    v_p = pack(v_proj)
    seq_lens = jnp.asarray(PREFILL_LENS, dtype=jnp.int32)

    attn_p = batch_prefill(q_p, k_p, v_p, seq_lens)    # [S, ML, Hq*D]
    pieces = [attn_p[i, :PREFILL_LENS[i]] for i in range(NUM_PREFILL_SEQS)]
    stack_attn_output.append(jnp.concatenate(pieces, axis=0))

    # ---------------- decode path ----------------
    q_d = q_proj[DOFF:].reshape(DECODE_BATCH, 1, QO_DIM)
    k_new = k_proj[DOFF:].reshape(DECODE_BATCH, 1, KV_DIM)
    v_new = v_proj[DOFF:].reshape(DECODE_BATCH, 1, KV_DIM)
    past_lens = jnp.asarray(DECODE_PAST_LENS, dtype=jnp.int32)

    # append_kv is fused into the decode kernel (new token written into the
    # VMEM copy of the cache at row past_len before attention).
    # TODO(synk): persisting the appended cache to HBM would use
    # input_output_aliases on the cache operands; the module returns only the
    # attention output, so that write-back is omitted here.
    attn_d = batch_decode(q_d, k_new, v_new, decode_k_cache, decode_v_cache,
                          past_lens)                   # [B, 1, Hq*D]
    stack_attn_output.append(attn_d.reshape(DECODE_BATCH, HIDDEN))

    attn_outputs = jnp.concatenate(stack_attn_output, axis=0)   # [T, hidden]
    return linear(attn_outputs, wo, out_dtype=jnp.float32)      # o_proj


# ----------------------------- pure-JAX reference ---------------------------
def reference_forward(hidden_states, wq, wk, wv, wo,
                      decode_k_cache, decode_v_cache):
    f32, bf16 = jnp.float32, jnp.bfloat16
    q_proj = jnp.dot(hidden_states, wq, preferred_element_type=f32).astype(bf16)
    k_proj = jnp.dot(hidden_states, wk, preferred_element_type=f32).astype(bf16)
    v_proj = jnp.dot(hidden_states, wv, preferred_element_type=f32).astype(bf16)

    outs = []
    for i in range(NUM_PREFILL_SEQS):
        s0, s1 = INDPTR[i], INDPTR[i + 1]
        L = s1 - s0
        qi = q_proj[s0:s1].reshape(L, NUM_QO_HEADS, HEAD_DIM).astype(f32)
        ki = jnp.repeat(k_proj[s0:s1].reshape(L, NUM_KV_HEADS, HEAD_DIM),
                        NUM_KV_GROUPS, axis=1).astype(f32)
        vi = jnp.repeat(v_proj[s0:s1].reshape(L, NUM_KV_HEADS, HEAD_DIM),
                        NUM_KV_GROUPS, axis=1).astype(f32)
        scores = jnp.einsum('qhd,khd->hqk', qi, ki) * SCALE
        mask = jnp.tril(jnp.ones((L, L), dtype=bool))
        scores = jnp.where(mask[None], scores, -1e30)
        m = jnp.max(scores, axis=-1, keepdims=True)
        p = jnp.exp(scores - m)
        denom = jnp.sum(p, axis=-1, keepdims=True)                 # [H, L, 1]
        p_b = p.astype(bf16).astype(f32)
        oi = jnp.einsum('hqk,khd->qhd', p_b, vi) / denom.transpose(1, 0, 2)
        outs.append(oi.astype(bf16).reshape(L, HIDDEN))

    q_d = q_proj[DOFF:].reshape(DECODE_BATCH, NUM_QO_HEADS, HEAD_DIM).astype(f32)
    k_new = k_proj[DOFF:]
    v_new = v_proj[DOFF:]
    dec_out = []
    for b in range(DECODE_BATCH):
        past = DECODE_PAST_LENS[b]
        clen = past + 1
        kb = decode_k_cache[b].at[past].set(k_new[b])
        vb = decode_v_cache[b].at[past].set(v_new[b])
        kb = jnp.repeat(kb.reshape(MAX_CACHE_LEN, NUM_KV_HEADS, HEAD_DIM),
                        NUM_KV_GROUPS, axis=1).astype(f32)         # [MC, Hq, D]
        vb = jnp.repeat(vb.reshape(MAX_CACHE_LEN, NUM_KV_HEADS, HEAD_DIM),
                        NUM_KV_GROUPS, axis=1).astype(f32)
        scores = jnp.einsum('hd,khd->hk', q_d[b], kb) * SCALE      # [Hq, MC]
        colmask = jnp.arange(MAX_CACHE_LEN)[None, :] < clen
        scores = jnp.where(colmask, scores, -1e30)
        m = jnp.max(scores, axis=-1, keepdims=True)
        p = jnp.exp(scores - m)
        denom = jnp.sum(p, axis=-1, keepdims=True)
        p_b = p.astype(bf16).astype(f32)
        ob = jnp.einsum('hk,khd->hd', p_b, vb) / denom
        dec_out.append(ob.astype(bf16).reshape(HIDDEN))
    outs.append(jnp.stack(dec_out))

    attn = jnp.concatenate(outs, axis=0)
    return jnp.dot(attn, wo, preferred_element_type=f32)


# ----------------------------- main ------------------------------------------
if __name__ == "__main__":
    key = jax.random.PRNGKey(0)
    ks = jax.random.split(key, 8)

    hidden_states = jax.random.normal(
        ks[0], (T_TOTAL, HIDDEN), jnp.float32).astype(jnp.bfloat16)
    # weights stored as [in, out] (== torch weight.T), bias-free, bf16
    wq = (jax.random.normal(ks[1], (HIDDEN, QO_DIM), jnp.float32)
          / math.sqrt(HIDDEN)).astype(jnp.bfloat16)
    wk = (jax.random.normal(ks[2], (HIDDEN, KV_DIM), jnp.float32)
          / math.sqrt(HIDDEN)).astype(jnp.bfloat16)
    wv = (jax.random.normal(ks[3], (HIDDEN, KV_DIM), jnp.float32)
          / math.sqrt(HIDDEN)).astype(jnp.bfloat16)
    wo = (jax.random.normal(ks[4], (QO_DIM, HIDDEN), jnp.float32)
          / math.sqrt(HIDDEN)).astype(jnp.bfloat16)

    # pre-existing decode KV cache, lane-dense layout [B, MC, Hkv*D]
    decode_k_cache = jax.random.normal(
        ks[5], (DECODE_BATCH, MAX_CACHE_LEN, KV_DIM), jnp.float32).astype(jnp.bfloat16)
    decode_v_cache = jax.random.normal(
        ks[6], (DECODE_BATCH, MAX_CACHE_LEN, KV_DIM), jnp.float32).astype(jnp.bfloat16)

    out = llama_attention_forward(hidden_states, wq, wk, wv, wo,
                                  decode_k_cache, decode_v_cache)
    out = jax.block_until_ready(out)

    ref = reference_forward(hidden_states, wq, wk, wv, wo,
                            decode_k_cache, decode_v_cache)
    ref = jax.block_until_ready(ref)

    assert out.shape == (T_TOTAL, HIDDEN), out.shape
    max_err = float(jnp.max(jnp.abs(out - ref)))
    assert jnp.allclose(out, ref, rtol=2e-2, atol=2e-2), max_err

    print("KERNEL_OK")
</pallas_src>

<mosaic_0001>
module attributes {stable_mosaic.version = 11 : i64} {
  func.func @_matmul_kernel(%arg0: i32, %arg1: i32, %arg2: i32, %arg3: memref<16x32xbf16, #tpu.memory_space<vmem>>, %arg4: memref<32x64xbf16, #tpu.memory_space<vmem>>, %arg5: memref<16x64xbf16, #tpu.memory_space<vmem>>, %arg6: memref<16x64xf32, #tpu.memory_space<vmem>>) attributes {dimension_semantics = [#tpu.dimension_semantics<parallel>, #tpu.dimension_semantics<parallel>, #tpu.dimension_semantics<arbitrary>], iteration_bounds = array<i64: 1, 1, 1>, scalar_prefetch = 0 : i64, scratch_operands = 1 : i64, tpu.core_type = #tpu.core_type<tc>, window_params = [{transform_indices = @transform_0, window_bounds = array<i64: 16, 32>}, {transform_indices = @transform_1, window_bounds = array<i64: 32, 64>}, {transform_indices = @transform_2, window_bounds = array<i64: 16, 64>}]} {
    %c0_i32 = arith.constant 0 : i32
    %0 = arith.cmpi eq, %arg2, %c0_i32 : i32
    %1 = arith.extui %0 : i1 to i32
    %c0_i32_0 = arith.constant 0 : i32
    %2 = arith.cmpi ne, %1, %c0_i32_0 : i32
    scf.if %2 {
      %cst_10 = arith.constant 0.000000e+00 : f32
      %12 = vector.broadcast %cst_10 : f32 to vector<16x64xf32>
      %c0_11 = arith.constant 0 : index
      %c0_12 = arith.constant 0 : index
      %13 = vector.load %arg6[%c0_11, %c0_12] : memref<16x64xf32, #tpu.memory_space<vmem>>, vector<16x64xf32>
      tpu.vector_store %arg6[%c0_11, %c0_12], %12 {strides = array<i32>} : memref<16x64xf32, #tpu.memory_space<vmem>>, vector<16x64xf32>,
    } else {
    }
    %c0 = arith.constant 0 : index
    %c0_1 = arith.constant 0 : index
    %3 = vector.load %arg6[%c0, %c0_1] : memref<16x64xf32, #tpu.memory_space<vmem>>, vector<16x64xf32>
    %c0_2 = arith.constant 0 : index
    %c0_3 = arith.constant 0 : index
    %4 = vector.load %arg3[%c0_2, %c0_3] : memref<16x32xbf16, #tpu.memory_space<vmem>>, vector<16x32xbf16>
    %c0_4 = arith.constant 0 : index
    %c0_5 = arith.constant 0 : index
    %5 = vector.load %arg4[%c0_4, %c0_5] : memref<32x64xbf16, #tpu.memory_space<vmem>>, vector<32x64xbf16>
    %cst = arith.constant dense<0.000000e+00> : vector<16x64xf32>
    %6 = tpu.matmul %4, %5, %cst {dimension_numbers = #tpu.dot_dimension_numbers<[1], [0], [0], [1], [0, 0, 1, 1], [], []>} : vector<16x32xbf16>, vector<32x64xbf16>, vector<16x64xf32> -> vector<16x64xf32>
    %7 = arith.addf %3, %6 : vector<16x64xf32>
    %c0_6 = arith.constant 0 : index
    %c0_7 = arith.constant 0 : index
    %8 = vector.load %arg6[%c0_6, %c0_7] : memref<16x64xf32, #tpu.memory_space<vmem>>, vector<16x64xf32>
    tpu.vector_store %arg6[%c0_6, %c0_7], %7 {strides = array<i32>} : memref<16x64xf32, #tpu.memory_space<vmem>>, vector<16x64xf32>,
    %c0_i32_8 = arith.constant 0 : i32
    %9 = arith.cmpi eq, %arg2, %c0_i32_8 : i32
    %10 = arith.extui %9 : i1 to i32
    %c0_i32_9 = arith.constant 0 : i32
    %11 = arith.cmpi ne, %10, %c0_i32_9 : i32
    scf.if %11 {
      %c0_10 = arith.constant 0 : index
      %c0_11 = arith.constant 0 : index
      %12 = vector.load %arg6[%c0_10, %c0_11] : memref<16x64xf32, #tpu.memory_space<vmem>>, vector<16x64xf32>
      %13 = arith.truncf %12 : vector<16x64xf32> to vector<16x64xbf16>
      %c0_12 = arith.constant 0 : index
      %c0_13 = arith.constant 0 : index
      %14 = vector.load %arg5[%c0_12, %c0_13] : memref<16x64xbf16, #tpu.memory_space<vmem>>, vector<16x64xbf16>
      tpu.vector_store %arg5[%c0_12, %c0_13], %13 {strides = array<i32>} : memref<16x64xbf16, #tpu.memory_space<vmem>>, vector<16x64xbf16>,
    } else {
    }
    return
  }
  func.func @transform_0(%arg0: i32, %arg1: i32, %arg2: i32) -> (i32, i32) {
    %c0_i32 = arith.constant 0 : i32
    return %arg0, %arg2 : i32, i32
  }
  func.func @transform_1(%arg0: i32, %arg1: i32, %arg2: i32) -> (i32, i32) {
    %c0_i32 = arith.constant 0 : i32
    return %arg2, %arg1 : i32, i32
  }
  func.func @transform_2(%arg0: i32, %arg1: i32, %arg2: i32) -> (i32, i32) {
    %c0_i32 = arith.constant 0 : i32
    return %arg0, %arg1 : i32, i32
  }
}

</mosaic_0001>

<llo_original>
// kernel: tpu_custom_call.1
$region0: #{tpu_custom_call.1}
  #allocation0 [shape = 'u32[]', space=smem, size = 0x4, offset = 0x4, fixed_abs, tag = 'smem constant byte address 0x4 - core index']
  #allocation1 [shape = 'u32[144,128]{1,0:T(1,128)}', space=vmem, size = 0x12000, scoped, tag = 'internal scratch']
  #allocation2 [shape = 'f32[16,64]{1,0:T(8,128)}', space=vmem, size = 0x2000, scoped, tag = 'scratch operand']
  %s0 = inlined_call_operand.hbm [shape: bf16[16,32], index: 0, kind: input, shape index: {}]
  %s1 = inlined_call_operand.hbm [shape: bf16[32,64], index: 1, kind: input, shape index: {}]
  %s2 = inlined_call_operand.hbm [shape: bf16[16,64], index: 2, kind: output, shape index: {}]
  %s3 = sld [smem:[#allocation0]]
  $region34: #{tpu_custom_call.1} parent=0
    _
  %s5 = ssub.s32 1, %s3
  %s6 = scalar_select 0, %s5, %s3
  $region1: #{tpu_custom_call.1} parent=0
    #allocation3 [shape = 'u8[4096]{0}', space=vmem, size = 0x1000, scoped, tag = 'input window, operand 0, single buffered']
    #allocation4 [shape = 's32[1]{0}', space=sflag, size = 0x4, scoped, tag = 'scoped memory for tpu_custom_call.1']
    #allocation5 [shape = 's32[1]{0}', space=sflag, size = 0x4, scoped, tag = 'scoped memory for tpu_custom_call.1']
    #allocation6 [shape = 'u8[8192]{0}', space=vmem, size = 0x2000, scoped, tag = 'input window, operand 1, single buffered']
    #allocation7 [shape = 's32[1]{0}', space=sflag, size = 0x4, scoped, tag = 'scoped memory for tpu_custom_call.1']
    #allocation8 [shape = 'u8[4096]{0}', space=vmem, size = 0x1000, scoped, tag = 'output window, operand 0, single buffered']
    %7 = vsyncpa [#allocation4], 0
    %8 = vsyncpa [#allocation7], 0
    %9 = vsyncpa [#allocation5], 0
    // Predicated region
    $region2: #{tpu_custom_call.1} parent=1 // pred_check
      _
    $region3: #{tpu_custom_call.1} parent=1 // pred_check_branch
      %11 = sbr.rel (0) target = $region5
    $region4: #{tpu_custom_call.1} parent=1 // pred_region
      %s13 = ssub.s32 128, 128
      %14 = vsyncadd [#allocation4], %s13
      %s15 = sshll.u32 [#allocation3], 4
      %s16 = int_to_ptr.vmem [resolvable:$true] %s15
      %21 = dma.hbm_to_vmem [thread:$0]  %s0, 128, %s16, [#allocation4], 64, 64, 4
    $region5: #{tpu_custom_call.1} parent=1 // pred_fallthru
      _
    // Predicated region
    $region6: #{tpu_custom_call.1} parent=1 // pred_check
      _
    $region7: #{tpu_custom_call.1} parent=1 // pred_check_branch
      %23 = sbr.rel (0) target = $region9
    $region8: #{tpu_custom_call.1} parent=1 // pred_region
      %s25 = ssub.s32 256, 256
      %26 = vsyncadd [#allocation7], %s25
      %s27 = sshll.u32 [#allocation6], 4
      %s28 = int_to_ptr.vmem [resolvable:$true] %s27
      %33 = dma.hbm_to_vmem [thread:$0]  %s1, 256, %s28, [#allocation7], 64, 64, 4
    $region9: #{tpu_custom_call.1} parent=1 // pred_fallthru
      _
    // Predicated region
    $region10: #{tpu_custom_call.1} parent=1 // pred_check
      _
    $region11: #{tpu_custom_call.1} parent=1 // pred_check_branch
      %35 = sbr.rel (0) target = $region13
    $region12: #{tpu_custom_call.1} parent=1 // pred_region
      %36 = dma.done [#allocation4], 128
    $region13: #{tpu_custom_call.1} parent=1 // pred_fallthru
      _
    // Predicated region
    $region14: #{tpu_custom_call.1} parent=1 // pred_check
      _
    $region15: #{tpu_custom_call.1} parent=1 // pred_check_branch
      %38 = sbr.rel (0) target = $region17
    $region16: #{tpu_custom_call.1} parent=1 // pred_region
      %39 = dma.done [#allocation7], 256
    $region17: #{tpu_custom_call.1} parent=1 // pred_fallthru
      _
    %p41 = scmp.eq.s32.totalorder 0, 0
    // Predicated region
    $region18: #{tpu_custom_call.1} parent=1 // pred_check
      %p42 = pneg %p41
    $region19: #{tpu_custom_call.1} parent=1 // pred_check_branch
      %44 = sbr.rel (%p42) target = $region21
    $region20: #{tpu_custom_call.1} parent=1 // pred_region
      %vm45 = vcmask 523264
      %46 = vst.msk [vmem:[#allocation2] sm:$0xff] %vm45, 0.0
      %47 = vst.msk [vmem:[#allocation2 + $0x8] sm:$0xff] %vm45, 0.0
    $region21: #{tpu_custom_call.1} parent=1 // pred_fallthru
      _
    %v48 = vld [vmem:[#allocation2] sm:$0xff]
    %v49 = vld [vmem:[#allocation2 + $0x8] sm:$0xff]
    %v50 = vld [vmem:[#allocation3] sm:$0xf]
    %v51 = vld [vmem:[#allocation3 + $0x4] sm:$0xf]
    %v52 = vld [vmem:[#allocation6] sm:$0xf]
    %v53 = vld [vmem:[#allocation6 + $0x4] sm:$0xf]
    %v54 = vld [vmem:[#allocation6 + $0x8] sm:$0xf]
    %v55 = vld [vmem:[#allocation6 + $0xc] sm:$0xf]
    %v58 = vunpack.c.l.b16 %v50
    %v59 = vunpack.c.l.b16 %v51
    %v60 = vpack.c.b16 %v59, %v58
    %v65 = vunpack.c.l.b16 %v52
    %v66 = vunpack.c.l.b16 %v53
    %v67 = vunpack.c.l.b16 %v54
    %v68 = vunpack.c.l.b16 %v55
    %v69 = vpack.c.b16 %v66, %v65
    %v70 = vpack.c.b16 %v68, %v67
    %vm73 = vcmask 261120
    %v75 = vsel %vm73, %v60, 0
    %77 = vmatprep.subr.bf16.mxu0 0
    %78 = vmatpush1.bf16.msra.mxu0 0
    %79 = vmatprep.subr.bf16.mxu0 0
    %80 = vmatpush1.bf16.msra.mxu0 0
    %81 = vmatprep.subr.bf16.mxu0 0
    %82 = vmatpush1.bf16.msra.mxu0 0
    %83 = vmatprep.subr.bf16.mxu0 0
    %84 = vmatpush1.bf16.msra.mxu0 0
    %85 = vmatprep.subr.bf16.mxu0 0
    %86 = vmatpush1.bf16.msra.mxu0 0
    %87 = vmatprep.subr.bf16.mxu0 0
    %88 = vmatpush1.bf16.msra.mxu0 0
    %89 = vmatprep.subr.bf16.mxu0 0
    %90 = vmatpush1.bf16.msra.mxu0 %v70
    %91 = vmatprep.subr.bf16.mxu0 0
    %92 = vmatpush1.bf16.msra.mxu0 %v69
    %93 = vmatprep.subr.bf16.mxu0 0
    %94 = vmatpush2.bf16.msra.mxu0 0
    %95 = vmatprep.subr.bf16.mxu0 0
    %96 = vmatpush2.bf16.msra.mxu0 0
    %97 = vmatprep.subr.bf16.mxu0 0
    %98 = vmatpush2.bf16.msra.mxu0 0
    %99 = vmatprep.subr.bf16.mxu0 0
    %100 = vmatpush2.bf16.msra.mxu0 0
    %101 = vmatprep.subr.bf16.mxu0 0
    %102 = vmatpush2.bf16.msra.mxu0 0
    %103 = vmatprep.subr.bf16.mxu0 0
    %104 = vmatpush2.bf16.msra.mxu0 0
    %105 = vmatprep.subr.bf16.mxu0 0
    %106 = vmatpush2.bf16.msra.mxu0 0
    %107 = vmatprep.subr.bf16.mxu0 0
    %108 = vmatpush2.bf16.msra.mxu0 0
    %109 = vmatprep.mubr.bf16.mxu0 0
    %110 = vmatmul.mubr.bf16.gmra.mxu0 %v75
    %v111 = vpop.f32.mrf.mxu0
    %v112 = vadd.f32 0.0, %v111
    %v113 = vpop.f32.mrf.mxu0
    %v114 = vpop.f32.mrf.mxu0
    %v115 = vadd.f32 0.0, %v114
    %v116 = vpop.f32.mrf.mxu0
    %117 = vdwg.mxu0
    %v118 = vadd.f32 %v48, %v112
    %v119 = vadd.f32 %v49, %v115
    %vm120 = vcmask 523264
    %121 = vst.msk [vmem:[#allocation2] sm:$0xff] %vm120, %v118
    %122 = vst.msk [vmem:[#allocation2 + $0x8] sm:$0xff] %vm120, %v119
    // Predicated region
    $region22: #{tpu_custom_call.1} parent=1 // pred_check
      %p123 = pneg %p41
    $region23: #{tpu_custom_call.1} parent=1 // pred_check_branch
      %125 = sbr.rel (%p123) target = $region25
    $region24: #{tpu_custom_call.1} parent=1 // pred_region
      %v126 = vld [vmem:[#allocation2] sm:$0xff]
      %v127 = vld [vmem:[#allocation2 + $0x8] sm:$0xff]
      %v128 = vpack.c.bf16 %v127, %v126
      %v130 = vunpack.c.l.b16 %v128
      %v131 = vunpack.c.h.b16 %v128
      %v132 = vpack.c.b16 %v130, %v130
      %v133 = vpack.c.b16 %v131, %v131
      %vm136 = vcmask 519168
      %137 = vst.msk [vmem:[#allocation8] sm:$0xf] %vm136, %v132
      %138 = vst.msk [vmem:[#allocation8 + $0x4] sm:$0xf] %vm136, %v133
    $region25: #{tpu_custom_call.1} parent=1 // pred_fallthru
      _
    // Predicated region
    $region26: #{tpu_custom_call.1} parent=1 // pred_check
      _
    $region27: #{tpu_custom_call.1} parent=1 // pred_check_branch
      %140 = sbr.rel (0) target = $region29
    $region28: #{tpu_custom_call.1} parent=1 // pred_region
      %s142 = ssub.s32 128, 128
      %143 = vsyncadd [#allocation5], %s142
      %s144 = sshll.u32 [#allocation8], 4
      %s145 = int_to_ptr.vmem [resolvable:$true] %s144
      %150 = dma.vmem_to_hbm [thread:$0]  %s145, 128, %s2, [#allocation5], 64, 64, 4
    $region29: #{tpu_custom_call.1} parent=1 // pred_fallthru
      _
    // Predicated region
    $region30: #{tpu_custom_call.1} parent=1 // pred_check
      _
    $region31: #{tpu_custom_call.1} parent=1 // pred_check_branch
      %152 = sbr.rel (0) target = $region33
    $region32: #{tpu_custom_call.1} parent=1 // pred_region
      %153 = dma.done [#allocation5], 128
    $region33: #{tpu_custom_call.1} parent=1 // pred_fallthru
      _
    %154 = vsyncpa [#allocation4], 1
    %155 = vsyncpa [#allocation7], 1
    %156 = vsyncpa [#allocation5], 1

</llo_original>
